<compile_context>
chip_gen: v7x
topology: tpu7x:2x2x1
jax: 0.10.0
libtpu: 0.0.40
codegen_flags: <defaults>
</compile_context>

<pallas_src>
import jax
import jax.numpy as jnp
from jax.experimental import pallas as pl
from jax.experimental.pallas import tpu as pltpu


def _policy_fwd_kernel(x_ref, w1_ref, b1_ref, w2_ref, b2_ref, o_ref):
    # fc1 + ReLU  (MXU matmul, f32 accumulation; bias folded into the same
    # VPU add that feeds the ReLU — no separate bias pass).
    h = jnp.dot(x_ref[...], w1_ref[...], preferred_element_type=jnp.float32)
    h = jnp.maximum(h + b1_ref[...], 0.0)

    # fc2
    logits = jnp.dot(h, w2_ref[...], preferred_element_type=jnp.float32)
    logits = logits + b2_ref[...]

    # Numerically-stable softmax along the action axis (torch dim=1).
    m = jnp.max(logits, axis=-1, keepdims=True)
    e = jnp.exp(logits - m)
    denom = jnp.sum(e, axis=-1, keepdims=True)
    o_ref[...] = (e / denom).astype(o_ref.dtype)


def policy_forward(x, w1, b1, w2, b2, *, max_batch_tile=512):
    """Pallas equivalent of Policy.forward.

    x : [B, input_size] f32
    w1: [input_size, hidden] f32, b1: [hidden] f32
    w2: [hidden, action]     f32, b2: [action] f32
    returns: [B, action] f32 (rows sum to 1)
    """
    B, in_size = x.shape
    hidden = w1.shape[1]
    action = w2.shape[1]

    b1_2d = b1.reshape(1, hidden)   # 2-D for TPU (sublane, lane) layout
    b2_2d = b2.reshape(1, action)

    # Batch is the only tiled axis.  Small B -> single whole-array block
    # (legal because block == full dim); large B -> 8-aligned tiles that
    # pipeline and shard across v7x's two TensorCores.
    tb = B if B <= max_batch_tile else max_batch_tile
    grid = (pl.cdiv(B, tb),)

    flops = 2 * B * in_size * hidden + 2 * B * hidden * action
    bytes_accessed = 4 * (B * in_size + in_size * hidden + hidden
                          + hidden * action + action + B * action)
    cost = pl.CostEstimate(flops=flops,
                           transcendentals=B * action,
                           bytes_accessed=bytes_accessed)

    return pl.pallas_call(
        _policy_fwd_kernel,
        out_shape=jax.ShapeDtypeStruct((B, action), x.dtype),
        grid=grid,
        in_specs=[
            pl.BlockSpec((tb, in_size), lambda i: (i, 0)),        # x tile
            pl.BlockSpec((in_size, hidden), lambda i: (0, 0)),    # W1 (resident)
            pl.BlockSpec((1, hidden), lambda i: (0, 0)),          # b1 (resident)
            pl.BlockSpec((hidden, action), lambda i: (0, 0)),     # W2 (resident)
            pl.BlockSpec((1, action), lambda i: (0, 0)),          # b2 (resident)
        ],
        out_specs=pl.BlockSpec((tb, action), lambda i: (i, 0)),
        compiler_params=pltpu.CompilerParams(
            dimension_semantics=("parallel",),   # batch axis -> megacore on v7x
        ),
        cost_estimate=cost,
    )(x, w1, b1_2d, w2, b2_2d)


if __name__ == "__main__":
    # Small shapes consistent with a REINFORCE policy head.
    batch = 8
    input_size = 32
    hidden_size = 64
    action_size = 4

    key = jax.random.PRNGKey(0)
    kx, kw1, kb1, kw2, kb2 = jax.random.split(key, 5)

    x = jax.random.normal(kx, (batch, input_size), dtype=jnp.float32)

    # Deterministic init mimicking nn.Linear's uniform(-1/sqrt(fan_in), ...).
    bound1 = 1.0 / jnp.sqrt(jnp.float32(input_size))
    w1 = jax.random.uniform(kw1, (input_size, hidden_size), dtype=jnp.float32,
                            minval=-bound1, maxval=bound1)
    b1 = jax.random.uniform(kb1, (hidden_size,), dtype=jnp.float32,
                            minval=-bound1, maxval=bound1)
    bound2 = 1.0 / jnp.sqrt(jnp.float32(hidden_size))
    w2 = jax.random.uniform(kw2, (hidden_size, action_size), dtype=jnp.float32,
                            minval=-bound2, maxval=bound2)
    b2 = jax.random.uniform(kb2, (action_size,), dtype=jnp.float32,
                            minval=-bound2, maxval=bound2)

    out = policy_forward(x, w1, b1, w2, b2)
    jax.block_until_ready(out)

    # Pure-JAX reference (same math as the PyTorch module).
    h_ref = jnp.maximum(
        jnp.dot(x, w1, precision=jax.lax.Precision.HIGHEST) + b1, 0.0)
    logits_ref = jnp.dot(h_ref, w2, precision=jax.lax.Precision.HIGHEST) + b2
    ref = jax.nn.softmax(logits_ref, axis=1)

    assert out.shape == (batch, action_size)
    assert jnp.allclose(out, ref, atol=1e-4, rtol=1e-4)
    assert jnp.allclose(jnp.sum(out, axis=1), 1.0, atol=1e-5)
    print("KERNEL_OK")
</pallas_src>

<mosaic_0001>
module attributes {stable_mosaic.version = 11 : i64} {
  func.func @_policy_fwd_kernel(%arg0: i32, %arg1: memref<8x32xf32, #tpu.memory_space<vmem>>, %arg2: memref<32x64xf32, #tpu.memory_space<vmem>>, %arg3: memref<1x64xf32, #tpu.memory_space<vmem>>, %arg4: memref<64x4xf32, #tpu.memory_space<vmem>>, %arg5: memref<1x4xf32, #tpu.memory_space<vmem>>, %arg6: memref<8x4xf32, #tpu.memory_space<vmem>>) attributes {dimension_semantics = [#tpu.dimension_semantics<parallel>], iteration_bounds = array<i64: 1>, scalar_prefetch = 0 : i64, scratch_operands = 0 : i64, tpu.core_type = #tpu.core_type<tc>, window_params = [{transform_indices = @transform_0, window_bounds = array<i64: 8, 32>}, {pipeline_mode = #tpu.pipeline_mode<synchronous>, transform_indices = @transform_1, window_bounds = array<i64: 32, 64>}, {pipeline_mode = #tpu.pipeline_mode<synchronous>, transform_indices = @transform_2, window_bounds = array<i64: 1, 64>}, {pipeline_mode = #tpu.pipeline_mode<synchronous>, transform_indices = @transform_3, window_bounds = array<i64: 64, 4>}, {pipeline_mode = #tpu.pipeline_mode<synchronous>, transform_indices = @transform_4, window_bounds = array<i64: 1, 4>}, {transform_indices = @transform_5, window_bounds = array<i64: 8, 4>}]} {
    %c0 = arith.constant 0 : index
    %c0_0 = arith.constant 0 : index
    %0 = vector.load %arg1[%c0, %c0_0] : memref<8x32xf32, #tpu.memory_space<vmem>>, vector<8x32xf32>
    %c0_1 = arith.constant 0 : index
    %c0_2 = arith.constant 0 : index
    %1 = vector.load %arg2[%c0_1, %c0_2] : memref<32x64xf32, #tpu.memory_space<vmem>>, vector<32x64xf32>
    %cst = arith.constant dense<0.000000e+00> : vector<8x64xf32>
    %2 = tpu.matmul %0, %1, %cst {dimension_numbers = #tpu.dot_dimension_numbers<[1], [0], [0], [1], [0, 0, 1, 1], [], []>} : vector<8x32xf32>, vector<32x64xf32>, vector<8x64xf32> -> vector<8x64xf32>
    %c0_3 = arith.constant 0 : index
    %c0_4 = arith.constant 0 : index
    %3 = vector.load %arg3[%c0_3, %c0_4] : memref<1x64xf32, #tpu.memory_space<vmem>>, vector<1x64xf32>
    %4 = vector.broadcast %3 : vector<1x64xf32> to vector<8x64xf32>
    %5 = arith.addf %2, %4 : vector<8x64xf32>
    %cst_5 = arith.constant 0.000000e+00 : f32
    %6 = vector.broadcast %cst_5 : f32 to vector<8x64xf32>
    %7 = arith.maximumf %5, %6 : vector<8x64xf32>
    %c0_6 = arith.constant 0 : index
    %c0_7 = arith.constant 0 : index
    %8 = vector.load %arg4[%c0_6, %c0_7] : memref<64x4xf32, #tpu.memory_space<vmem>>, vector<64x4xf32>
    %cst_8 = arith.constant dense<0.000000e+00> : vector<8x4xf32>
    %9 = tpu.matmul %7, %8, %cst_8 {dimension_numbers = #tpu.dot_dimension_numbers<[1], [0], [0], [1], [0, 0, 1, 1], [], []>} : vector<8x64xf32>, vector<64x4xf32>, vector<8x4xf32> -> vector<8x4xf32>
    %c0_9 = arith.constant 0 : index
    %c0_10 = arith.constant 0 : index
    %10 = vector.load %arg5[%c0_9, %c0_10] : memref<1x4xf32, #tpu.memory_space<vmem>>, vector<1x4xf32>
    %11 = vector.broadcast %10 : vector<1x4xf32> to vector<8x4xf32>
    %12 = arith.addf %9, %11 : vector<8x4xf32>
    %cst_11 = arith.constant dense<0xFF800000> : vector<8xf32>
    %13 = vector.multi_reduction <maximumf>, %12, %cst_11 [1] : vector<8x4xf32> to vector<8xf32>
    %14 = vector.shape_cast %13 : vector<8xf32> to vector<8x1xf32>
    %15 = vector.broadcast %14 : vector<8x1xf32> to vector<8x4xf32>
    %16 = arith.subf %12, %15 : vector<8x4xf32>
    %17 = math.exp %16 : vector<8x4xf32>
    %cst_12 = arith.constant dense<0.000000e+00> : vector<8xf32>
    %18 = vector.multi_reduction <add>, %17, %cst_12 [1] : vector<8x4xf32> to vector<8xf32>
    %19 = vector.shape_cast %18 : vector<8xf32> to vector<8x1xf32>
    %20 = vector.broadcast %19 : vector<8x1xf32> to vector<8x4xf32>
    %21 = arith.divf %17, %20 : vector<8x4xf32>
    %c0_13 = arith.constant 0 : index
    %c0_14 = arith.constant 0 : index
    %22 = vector.load %arg6[%c0_13, %c0_14] : memref<8x4xf32, #tpu.memory_space<vmem>>, vector<8x4xf32>
    tpu.vector_store %arg6[%c0_13, %c0_14], %21 {strides = array<i32>} : memref<8x4xf32, #tpu.memory_space<vmem>>, vector<8x4xf32>,
    return
  }
  func.func @transform_0(%arg0: i32) -> (i32, i32) {
    %c0_i32 = arith.constant 0 : i32
    %c0_i32_0 = arith.constant 0 : i32
    return %arg0, %c0_i32 : i32, i32
  }
  func.func @transform_1(%arg0: i32) -> (i32, i32) {
    %c0_i32 = arith.constant 0 : i32
    %c0_i32_0 = arith.constant 0 : i32
    %c0_i32_1 = arith.constant 0 : i32
    return %c0_i32, %c0_i32_0 : i32, i32
  }
  func.func @transform_2(%arg0: i32) -> (i32, i32) {
    %c0_i32 = arith.constant 0 : i32
    %c0_i32_0 = arith.constant 0 : i32
    %c0_i32_1 = arith.constant 0 : i32
    return %c0_i32, %c0_i32_0 : i32, i32
  }
  func.func @transform_3(%arg0: i32) -> (i32, i32) {
    %c0_i32 = arith.constant 0 : i32
    %c0_i32_0 = arith.constant 0 : i32
    %c0_i32_1 = arith.constant 0 : i32
    return %c0_i32, %c0_i32_0 : i32, i32
  }
  func.func @transform_4(%arg0: i32) -> (i32, i32) {
    %c0_i32 = arith.constant 0 : i32
    %c0_i32_0 = arith.constant 0 : i32
    %c0_i32_1 = arith.constant 0 : i32
    return %c0_i32, %c0_i32_0 : i32, i32
  }
  func.func @transform_5(%arg0: i32) -> (i32, i32) {
    %c0_i32 = arith.constant 0 : i32
    %c0_i32_0 = arith.constant 0 : i32
    return %arg0, %c0_i32 : i32, i32
  }
}

</mosaic_0001>

<llo_original>
// kernel: tpu_custom_call.1
$region0: #{tpu_custom_call.1}
  #allocation0 [shape = 'u32[]', space=smem, size = 0x4, offset = 0x4, fixed_abs, tag = 'smem constant byte address 0x4 - core index']
  #allocation1 [shape = 'u32[144,128]{1,0:T(1,128)}', space=vmem, size = 0x12000, scoped, tag = 'internal scratch']
  %s0 = inlined_call_operand.vmem [shape: f32[8,32], index: 0, kind: input, shape index: {}]
  %s1 = inlined_call_operand.vmem [shape: f32[32,64], index: 1, kind: input, shape index: {}]
  %s2 = inlined_call_operand.vmem [shape: f32[1,64], index: 2, kind: input, shape index: {}]
  %s3 = inlined_call_operand.vmem [shape: f32[64,4], index: 3, kind: input, shape index: {}]
  %s4 = inlined_call_operand.vmem [shape: f32[1,4], index: 4, kind: input, shape index: {}]
  %s5 = inlined_call_operand.vmem [shape: f32[8,4], index: 5, kind: output, shape index: {}]
  %s6 = sld [smem:[#allocation0]]
  $region30: #{tpu_custom_call.1} parent=0
    _
  %s8 = ssub.s32 1, %s6
  %s9 = scalar_select 0, %s8, %s6
  // Predicated region
  $region2: #{tpu_custom_call.1} parent=0 // pred_check
    _
  $region3: #{tpu_custom_call.1} parent=0 // pred_check_branch
    %11 = sbr.rel (0) target = $region5
  $region4: #{tpu_custom_call.1} parent=0 // pred_region
    _
  $region5: #{tpu_custom_call.1} parent=0 // pred_fallthru
    _
  // Predicated region
  $region6: #{tpu_custom_call.1} parent=0 // pred_check
    _
  $region7: #{tpu_custom_call.1} parent=0 // pred_check_branch
    %13 = sbr.rel (0) target = $region9
  $region8: #{tpu_custom_call.1} parent=0 // pred_region
    _
  $region9: #{tpu_custom_call.1} parent=0 // pred_fallthru
    _
  // Predicated region
  $region10: #{tpu_custom_call.1} parent=0 // pred_check
    _
  $region11: #{tpu_custom_call.1} parent=0 // pred_check_branch
    %15 = sbr.rel (0) target = $region13
  $region12: #{tpu_custom_call.1} parent=0 // pred_region
    _
  $region13: #{tpu_custom_call.1} parent=0 // pred_fallthru
    _
  // Predicated region
  $region14: #{tpu_custom_call.1} parent=0 // pred_check
    _
  $region15: #{tpu_custom_call.1} parent=0 // pred_check_branch
    %17 = sbr.rel (0) target = $region17
  $region16: #{tpu_custom_call.1} parent=0 // pred_region
    _
  $region17: #{tpu_custom_call.1} parent=0 // pred_fallthru
    _
  // Predicated region
  $region18: #{tpu_custom_call.1} parent=0 // pred_check
    _
  $region19: #{tpu_custom_call.1} parent=0 // pred_check_branch
    %19 = sbr.rel (0) target = $region21
  $region20: #{tpu_custom_call.1} parent=0 // pred_region
    _
  $region21: #{tpu_custom_call.1} parent=0 // pred_fallthru
    _
  %v20 = vld [vmem:[%s0] sm:$0xff]
  %v21 = vld [vmem:[%s1] sm:$0xff]
  %v22 = vld [vmem:[%s1 + $0x8] sm:$0xff]
  %v23 = vld [vmem:[%s1 + $0x10] sm:$0xff]
  %v24 = vld [vmem:[%s1 + $0x18] sm:$0xff]
  %v25 = vld [vmem:[%s2] sm:$0x1]
  %v27 = vlaneseq
  %v28 = vshrl.u32 %v27, 7
  %v29 = vsub.s32 0, %v28
  %v30 = vrot.slane %v25, %v29
  %vm32 = vcmask 261120
  %v34 = vsel %vm32, %v20, 0
  %36 = vmatprep.subr.mxu0 0.0
  %37 = vmatpush1.msra.mxu0 %v21
  %38 = vmatprep.subr.mxu0 0.0
  %39 = vmatpush1.msra.mxu0 %v22
  %40 = vmatprep.subr.mxu0 0.0
  %41 = vmatpush1.msra.mxu0 %v23
  %42 = vmatprep.subr.mxu0 0.0
  %43 = vmatpush1.msra.mxu0 %v24
  %44 = vmatprep.subr.mxu0 0.0
  %45 = vmatpush1.msra.mxu0 0.0
  %46 = vmatprep.subr.mxu0 0.0
  %47 = vmatpush1.msra.mxu0 0.0
  %48 = vmatprep.subr.mxu0 0.0
  %49 = vmatpush1.msra.mxu0 0.0
  %50 = vmatprep.subr.mxu0 0.0
  %51 = vmatpush1.msra.mxu0 0.0
  %52 = vmatprep.subr.mxu0 0.0
  %53 = vmatpush1.msra.mxu0 0.0
  %54 = vmatprep.subr.mxu0 0.0
  %55 = vmatpush1.msra.mxu0 0.0
  %56 = vmatprep.subr.mxu0 0.0
  %57 = vmatpush1.msra.mxu0 0.0
  %58 = vmatprep.subr.mxu0 0.0
  %59 = vmatpush1.msra.mxu0 0.0
  %60 = vmatprep.subr.mxu0 0.0
  %61 = vmatpush1.msra.mxu0 0.0
  %62 = vmatprep.subr.mxu0 0.0
  %63 = vmatpush1.msra.mxu0 0.0
  %64 = vmatprep.subr.mxu0 0.0
  %65 = vmatpush1.msra.mxu0 0.0
  %66 = vmatprep.subr.mxu0 0.0
  %67 = vmatpush1.msra.mxu0 0.0
  %68 = vmatprep.subr.mxu0 0.0
  %69 = vmatpush1.msra.mxu0 0.0
  %70 = vmatprep.subr.mxu0 0.0
  %71 = vmatpush1.msra.mxu0 0.0
  %72 = vmatprep.subr.mxu0 0.0
  %73 = vmatpush1.msra.mxu0 0.0
  %74 = vmatprep.subr.mxu0 0.0
  %75 = vmatpush1.msra.mxu0 0.0
  %76 = vmatprep.subr.mxu0 0.0
  %77 = vmatpush1.msra.mxu0 0.0
  %78 = vmatprep.subr.mxu0 0.0
  %79 = vmatpush1.msra.mxu0 0.0
  %80 = vmatprep.subr.mxu0 0.0
  %81 = vmatpush1.msra.mxu0 0.0
  %82 = vmatprep.subr.mxu0 0.0
  %83 = vmatpush1.msra.mxu0 0.0
  %84 = vmatprep.subr.mxu0 0.0
  %85 = vmatpush1.msra.mxu0 0.0
  %86 = vmatprep.subr.mxu0 0.0
  %87 = vmatpush1.msra.mxu0 0.0
  %88 = vmatprep.subr.mxu0 0.0
  %89 = vmatpush1.msra.mxu0 0.0
  %90 = vmatprep.subr.mxu0 0.0
  %91 = vmatpush1.msra.mxu0 0.0
  %92 = vmatprep.subr.mxu0 0.0
  %93 = vmatpush1.msra.mxu0 0.0
  %94 = vmatprep.subr.mxu0 0.0
  %95 = vmatpush1.msra.mxu0 0.0
  %96 = vmatprep.subr.mxu0 0.0
  %97 = vmatpush1.msra.mxu0 0.0
  %98 = vmatprep.subr.mxu0 0.0
  %99 = vmatpush1.msra.mxu0 0.0
  %100 = vmatprep.mubr.f32.mxu0 0.0
  %101 = vmatmul.mubr.f32.gmra.mrb[0].mxu0 %v34
  %v102 = vpop.f32.mrb[0].mxu0
  %v103 = vadd.f32 %v30, %v102
  %v104 = vpop.f32.mrb[0].mxu0
  %105 = vdwg.mxu0
  %v106 = vmax.f32 %v103, 0.0
  %v107 = vld [vmem:[%s3] sm:$0xff]
  %v108 = vld [vmem:[%s3 + $0x8] sm:$0xff]
  %v109 = vld [vmem:[%s3 + $0x10] sm:$0xff]
  %v110 = vld [vmem:[%s3 + $0x18] sm:$0xff]
  %v111 = vld [vmem:[%s3 + $0x20] sm:$0xff]
  %v112 = vld [vmem:[%s3 + $0x28] sm:$0xff]
  %v113 = vld [vmem:[%s3 + $0x30] sm:$0xff]
  %v114 = vld [vmem:[%s3 + $0x38] sm:$0xff]
  %v115 = vld [vmem:[%s4] sm:$0x1]
  %v117 = vlaneseq
  %v118 = vshrl.u32 %v117, 7
  %v119 = vsub.s32 0, %v118
  %v120 = vrot.slane %v115, %v119
  %vm122 = vcmask 523264
  %v124 = vsel %vm122, %v106, 0
  %126 = vmatprep.subr.mxu0 0.0
  %127 = vmatpush1.msra.mxu0 %v107
  %128 = vmatprep.subr.mxu0 0.0
  %129 = vmatpush1.msra.mxu0 %v108
  %130 = vmatprep.subr.mxu0 0.0
  %131 = vmatpush1.msra.mxu0 %v109
  %132 = vmatprep.subr.mxu0 0.0
  %133 = vmatpush1.msra.mxu0 %v110
  %134 = vmatprep.subr.mxu0 0.0
  %135 = vmatpush1.msra.mxu0 %v111
  %136 = vmatprep.subr.mxu0 0.0
  %137 = vmatpush1.msra.mxu0 %v112
  %138 = vmatprep.subr.mxu0 0.0
  %139 = vmatpush1.msra.mxu0 %v113
  %140 = vmatprep.subr.mxu0 0.0
  %141 = vmatpush1.msra.mxu0 %v114
  %142 = vmatprep.subr.mxu0 0.0
  %143 = vmatpush1.msra.mxu0 0.0
  %144 = vmatprep.subr.mxu0 0.0
  %145 = vmatpush1.msra.mxu0 0.0
  %146 = vmatprep.subr.mxu0 0.0
  %147 = vmatpush1.msra.mxu0 0.0
  %148 = vmatprep.subr.mxu0 0.0
  %149 = vmatpush1.msra.mxu0 0.0
  %150 = vmatprep.subr.mxu0 0.0
  %151 = vmatpush1.msra.mxu0 0.0
  %152 = vmatprep.subr.mxu0 0.0
  %153 = vmatpush1.msra.mxu0 0.0
  %154 = vmatprep.subr.mxu0 0.0
  %155 = vmatpush1.msra.mxu0 0.0
  %156 = vmatprep.subr.mxu0 0.0
  %157 = vmatpush1.msra.mxu0 0.0
  %158 = vmatprep.subr.mxu0 0.0
  %159 = vmatpush1.msra.mxu0 0.0
  %160 = vmatprep.subr.mxu0 0.0
  %161 = vmatpush1.msra.mxu0 0.0
  %162 = vmatprep.subr.mxu0 0.0
  %163 = vmatpush1.msra.mxu0 0.0
  %164 = vmatprep.subr.mxu0 0.0
  %165 = vmatpush1.msra.mxu0 0.0
  %166 = vmatprep.subr.mxu0 0.0
  %167 = vmatpush1.msra.mxu0 0.0
  %168 = vmatprep.subr.mxu0 0.0
  %169 = vmatpush1.msra.mxu0 0.0
  %170 = vmatprep.subr.mxu0 0.0
  %171 = vmatpush1.msra.mxu0 0.0
  %172 = vmatprep.subr.mxu0 0.0
  %173 = vmatpush1.msra.mxu0 0.0
  %174 = vmatprep.subr.mxu0 0.0
  %175 = vmatpush1.msra.mxu0 0.0
  %176 = vmatprep.subr.mxu0 0.0
  %177 = vmatpush1.msra.mxu0 0.0
  %178 = vmatprep.subr.mxu0 0.0
  %179 = vmatpush1.msra.mxu0 0.0
  %180 = vmatprep.subr.mxu0 0.0
  %181 = vmatpush1.msra.mxu0 0.0
  %182 = vmatprep.subr.mxu0 0.0
  %183 = vmatpush1.msra.mxu0 0.0
  %184 = vmatprep.subr.mxu0 0.0
  %185 = vmatpush1.msra.mxu0 0.0
  %186 = vmatprep.subr.mxu0 0.0
  %187 = vmatpush1.msra.mxu0 0.0
  %188 = vmatprep.subr.mxu0 0.0
  %189 = vmatpush1.msra.mxu0 0.0
  %190 = vmatprep.mubr.f32.mxu0 0.0
  %191 = vmatmul.mubr.f32.gmra.mrb[0].mxu0 %v124
  %v192 = vpop.f32.mrb[0].mxu0
  %v193 = vadd.f32 %v120, %v192
  %v194 = vpop.f32.mrb[0].mxu0
  %195 = vdwg.mxu0
  %vm196 = vcmask 31744
  %v197 = vsel %vm196, %v193, -inf
  %198 = vmax.xlane.f32.xlu0 %v197
  %v199 = vpop.xlane.xlu0 %198
  %v200 = vsub.f32 %v193, %v199
  %v201 = vmul.f32 %v200, 1.442695
  %v202 = vpow.pop %v201
  %v203 = vsel %vm196, %v202, 0.0
  %204 = vadd.xlane.f32.xlu0 %v203
  %v205 = vpop.xlane.xlu0 %204
  %v206 = vrcp.pop %v205
  %v207 = vmul.f32 %v202, %v206
  %208 = vst.msk [vmem:[%s5] sm:$0xff] %vm196, %v207
  // Predicated region
  $region22: #{tpu_custom_call.1} parent=0 // pred_check
    _
  $region23: #{tpu_custom_call.1} parent=0 // pred_check_branch
    %210 = sbr.rel (0) target = $region25
  $region24: #{tpu_custom_call.1} parent=0 // pred_region
    _
  $region25: #{tpu_custom_call.1} parent=0 // pred_fallthru
    _
  // Predicated region
  $region26: #{tpu_custom_call.1} parent=0 // pred_check
    _
  $region27: #{tpu_custom_call.1} parent=0 // pred_check_branch
    %212 = sbr.rel (0) target = $region29
  $region28: #{tpu_custom_call.1} parent=0 // pred_region
    _
  $region29: #{tpu_custom_call.1} parent=0 // pred_fallthru
    _

</llo_original>
